<compile_context>
chip_gen: v7x
topology: tpu7x:2x2x1
jax: 0.10.0
libtpu: 0.0.40
codegen_flags: <defaults>
</compile_context>

<pallas_src>
import functools

import jax
import jax.numpy as jnp
from jax import lax
from jax.experimental import pallas as pl
from jax.experimental.pallas import tpu as pltpu

SMOOTH = 1.0       # dice smoothing
TB_MAX = 512       # sublane rows per grid step (512 * 128 = 65536 pixels/step)
VMEM_STEP_BUDGET = 14 << 20   # per-step working-set budget (bytes)


def _round_up(x, m):
    return (x + m - 1) // m * m


def _dfn_loss_kernel(df_ref, dfgt_ref, score_ref, skel_ref, out_ref, acc_ref,
                     *, num_classes, df_channels, rows, tb, mask_rows):
    """Accumulate per-lane partial sums for one batch image; reduce on last k.

    acc_ref (VMEM f32[5, tb, 128]) slots:
      0: squared directField diffs       (summed over df channels)
      1: per-pixel cross-entropy         (masked for pad / out-of-range rows)
      2: p1 * target                     (dice intersection)
      3: p1
      4: target
    Output slab (8, 128): sublane i, lane 0 holds raw sum i (i in 0..4).
    """
    k = pl.program_id(1)

    @pl.when(k == 0)
    def _init():
        acc_ref[...] = jnp.zeros_like(acc_ref)

    t = skel_ref[0, 0]                               # (tb, 128) int labels; -1 = lane pad

    if mask_rows:
        row_ids = lax.broadcasted_iota(jnp.int32, (tb, 128), 0)
        row_ok = (k * tb + row_ids) < rows           # mask ragged last row-block
        lab_ok = jnp.logical_and(row_ok, t >= 0)
    else:
        row_ok = None
        lab_ok = t >= 0

    # ---- MSE partial (per df channel, per lane) ---------------------------
    mse_slab = jnp.zeros((tb, 128), jnp.float32)
    for cc in range(df_channels):
        d = df_ref[0, cc].astype(jnp.float32) - dfgt_ref[0, cc].astype(jnp.float32)
        mse_slab = mse_slab + d * d
    if mask_rows:
        mse_slab = jnp.where(row_ok, mse_slab, 0.0)

    # ---- softmax CE + dice partials: max pass + one fused class pass ------
    smax = score_ref[0, 0].astype(jnp.float32)
    for cc in range(1, num_classes):
        smax = jnp.maximum(smax, score_ref[0, cc].astype(jnp.float32))

    sumex = jnp.zeros((tb, 128), jnp.float32)
    s_t = jnp.zeros((tb, 128), jnp.float32)
    e1 = None
    for cc in range(num_classes):
        s_c = score_ref[0, cc].astype(jnp.float32)
        e = jnp.exp(s_c - smax)
        sumex = sumex + e
        s_t = jnp.where(t == cc, s_c, s_t)
        if cc == 1:
            e1 = e

    lse = jnp.log(sumex) + smax
    ce_slab = jnp.where(lab_ok, lse - s_t, 0.0)
    p1 = jnp.where(lab_ok, e1 / sumex, 0.0)          # P(class 1), exact divide
    tgt = jnp.logical_and(lab_ok, t == 1).astype(jnp.float32)

    acc_ref[0] = acc_ref[0] + mse_slab
    acc_ref[1] = acc_ref[1] + ce_slab
    acc_ref[2] = acc_ref[2] + p1 * tgt
    acc_ref[3] = acc_ref[3] + p1
    acc_ref[4] = acc_ref[4] + tgt

    # ---- finalize: one cross-lane reduction per batch image ---------------
    @pl.when(k == pl.num_programs(1) - 1)
    def _final():
        ridx = lax.broadcasted_iota(jnp.int32, (8, 128), 0)
        slab = jnp.where(ridx == 0, jnp.sum(acc_ref[0]), 0.0)
        slab = jnp.where(ridx == 1, jnp.sum(acc_ref[1]), slab)
        slab = jnp.where(ridx == 2, jnp.sum(acc_ref[2]), slab)
        slab = jnp.where(ridx == 3, jnp.sum(acc_ref[3]), slab)
        slab = jnp.where(ridx == 4, jnp.sum(acc_ref[4]), slab)
        out_ref[0] = slab


def dfn_loss_plus_dice(direct_field, score, direct_field_gt, skeleton_gt):
    """JAX wrapper.  Inputs follow the PyTorch NCHW convention:
         direct_field, direct_field_gt : (N, Cd, H, W) float (f32 or bf16)
         score                         : (N, C,  H, W) float logits
         skeleton_gt                   : (N, H, W) int labels in [0, C)
    """
    n, dfc, h, w = direct_field.shape
    c = score.shape[1]
    assert c >= 2, "dice term assumes at least 2 classes"
    hw = h * w
    n_pix = n * hw
    n_df_elems = n * dfc * hw

    # ---- layout: pixels as (rows, 128); lane pad only if hw % 128 != 0 ----
    hw_pad = _round_up(hw, 128)
    rows = hw_pad // 128

    def prep(x, pad_val):
        x = x.reshape(x.shape[0], x.shape[1], hw)            # free view
        if hw_pad != hw:                                      # copy only if needed
            x = jnp.pad(x, ((0, 0), (0, 0), (0, hw_pad - hw)),
                        constant_values=pad_val)
        return x.reshape(x.shape[0], x.shape[1], rows, 128)

    df = prep(direct_field, 0)
    dfgt = prep(direct_field_gt, 0)
    sc = prep(score, 0)
    sk = prep(skeleton_gt.astype(jnp.int32).reshape(n, 1, h, w), -1)

    # ---- tile choice: full rows for small images, else 512-row blocks -----
    tb = rows if rows <= TB_MAX else TB_MAX

    def _step_bytes(tb_):
        in_block = ((df.dtype.itemsize * dfc) * 2 + sc.dtype.itemsize * c
                    + sk.dtype.itemsize) * tb_ * 128
        return 2 * in_block + 5 * tb_ * 128 * 4               # dbl-buf in + acc

    while _step_bytes(tb) > VMEM_STEP_BUDGET and tb > 8:      # rare (huge C)
        tb = max(8, _round_up(tb // 2, 8))

    nk = (rows + tb - 1) // tb
    mask_rows = (nk * tb != rows)

    vmem_limit = int(min(max(int(_step_bytes(tb) * 1.75) + (8 * 128 * 4) * 2,
                             16 << 20), 32 << 20))

    total_bytes = (df.size * df.dtype.itemsize + dfgt.size * dfgt.dtype.itemsize
                   + sc.size * sc.dtype.itemsize + sk.size * sk.dtype.itemsize
                   + n * 8 * 128 * 4)
    cost = pl.CostEstimate(
        flops=int((3 * dfc + 8 * c + 16) * n_pix),
        transcendentals=int((c + 1) * n_pix),
        bytes_accessed=int(total_bytes))

    kernel = functools.partial(_dfn_loss_kernel, num_classes=c,
                               df_channels=dfc, rows=rows, tb=tb,
                               mask_rows=mask_rows)

    out = pl.pallas_call(
        kernel,
        out_shape=jax.ShapeDtypeStruct((n, 8, 128), jnp.float32),
        grid_spec=pltpu.PrefetchScalarGridSpec(
            num_scalar_prefetch=0,
            grid=(n, nk),
            in_specs=[
                pl.BlockSpec((1, dfc, tb, 128), lambda b, k: (b, 0, k, 0)),
                pl.BlockSpec((1, dfc, tb, 128), lambda b, k: (b, 0, k, 0)),
                pl.BlockSpec((1, c, tb, 128), lambda b, k: (b, 0, k, 0)),
                pl.BlockSpec((1, 1, tb, 128), lambda b, k: (b, 0, k, 0)),
            ],
            out_specs=pl.BlockSpec((1, 8, 128), lambda b, k: (b, 0, 0)),
            scratch_shapes=[pltpu.VMEM((5, tb, 128), jnp.float32)],
        ),
        compiler_params=pltpu.CompilerParams(
            dimension_semantics=("parallel", "arbitrary"),
            vmem_limit_bytes=vmem_limit),
        cost_estimate=cost,
    )(df, dfgt, sc, sk)

    # ---- tiny finalization on the (n, 5) per-batch partials ---------------
    partials = jnp.sum(out[:, :5, 0], axis=0)                 # (5,)
    mse = partials[0] / jnp.float32(n_df_elems)
    ce = partials[1] / jnp.float32(n_pix)
    dice = 1.0 - (2.0 * partials[2] + SMOOTH) / (partials[3] + partials[4] + SMOOTH)
    return mse + ce + dice


def _reference_loss(direct_field, score, direct_field_gt, skeleton_gt):
    """Pure-JAX reference for validation."""
    mse = jnp.mean((direct_field - direct_field_gt) ** 2)
    c = score.shape[1]
    logits = jnp.transpose(score, (0, 2, 3, 1)).reshape(-1, c)
    labels = skeleton_gt.reshape(-1).astype(jnp.int32)
    lse = jax.scipy.special.logsumexp(logits, axis=-1)
    s_t = jnp.take_along_axis(logits, labels[:, None], axis=1)[:, 0]
    ce = jnp.mean(lse - s_t)
    p1 = jax.nn.softmax(logits, axis=-1)[:, 1]
    t = (labels == 1).astype(jnp.float32)
    dice = 1.0 - (2.0 * jnp.sum(p1 * t) + SMOOTH) / (jnp.sum(p1) + jnp.sum(t) + SMOOTH)
    return mse + ce + dice


if __name__ == "__main__":
    key = jax.random.PRNGKey(0)
    k1, k2, k3, k4 = jax.random.split(key, 4)

    N, H, W = 2, 16, 16
    DF_C, NUM_CLASSES = 2, 2

    direct_field = jax.random.normal(k1, (N, DF_C, H, W), dtype=jnp.float32)
    direct_field_gt = jax.random.normal(k2, (N, DF_C, H, W), dtype=jnp.float32)
    score = jax.random.normal(k3, (N, NUM_CLASSES, H, W), dtype=jnp.float32)
    skeleton_gt = jax.random.randint(k4, (N, H, W), 0, NUM_CLASSES, dtype=jnp.int32)

    loss = dfn_loss_plus_dice(direct_field, score, direct_field_gt, skeleton_gt)
    loss = jax.block_until_ready(loss)

    ref = _reference_loss(direct_field, score, direct_field_gt, skeleton_gt)
    assert jnp.allclose(loss, ref, rtol=5e-4, atol=1e-5), (loss, ref)

    print("KERNEL_OK")
</pallas_src>

<mosaic_0001>
module attributes {stable_mosaic.version = 11 : i64} {
  func.func @_dfn_loss_kernel(%arg0: i32, %arg1: i32, %arg2: memref<1x2x2x128xf32, #tpu.memory_space<vmem>>, %arg3: memref<1x2x2x128xf32, #tpu.memory_space<vmem>>, %arg4: memref<1x2x2x128xf32, #tpu.memory_space<vmem>>, %arg5: memref<1x1x2x128xi32, #tpu.memory_space<vmem>>, %arg6: memref<1x8x128xf32, #tpu.memory_space<vmem>>, %arg7: memref<5x2x128xf32, #tpu.memory_space<vmem>>) attributes {dimension_semantics = [#tpu.dimension_semantics<parallel>, #tpu.dimension_semantics<arbitrary>], iteration_bounds = array<i64: 2, 1>, scalar_prefetch = 0 : i64, scratch_operands = 1 : i64, tpu.core_type = #tpu.core_type<tc>, window_params = [{transform_indices = @transform_0, window_bounds = array<i64: 1, 2, 2, 128>}, {transform_indices = @transform_1, window_bounds = array<i64: 1, 2, 2, 128>}, {transform_indices = @transform_2, window_bounds = array<i64: 1, 2, 2, 128>}, {transform_indices = @transform_3, window_bounds = array<i64: 1, 1, 2, 128>}, {transform_indices = @transform_4, window_bounds = array<i64: 1, 8, 128>}]} {
    %c0_i32 = arith.constant 0 : i32
    %0 = arith.cmpi eq, %arg1, %c0_i32 : i32
    %1 = arith.extui %0 : i1 to i32
    %c0_i32_0 = arith.constant 0 : i32
    %2 = arith.cmpi ne, %1, %c0_i32_0 : i32
    scf.if %2 {
      %cst_71 = arith.constant 0.000000e+00 : f32
      %92 = vector.broadcast %cst_71 : f32 to vector<5x2x128xf32>
      %c0_72 = arith.constant 0 : index
      %c0_73 = arith.constant 0 : index
      %c0_74 = arith.constant 0 : index
      %93 = vector.load %arg7[%c0_72, %c0_73, %c0_74] : memref<5x2x128xf32, #tpu.memory_space<vmem>>, vector<5x2x128xf32>
      tpu.vector_store %arg7[%c0_72, %c0_73, %c0_74], %92 {strides = array<i32>} : memref<5x2x128xf32, #tpu.memory_space<vmem>>, vector<5x2x128xf32>,
    } else {
    }
    %c0 = arith.constant 0 : index
    %c0_1 = arith.constant 0 : index
    %c0_2 = arith.constant 0 : index
    %c0_3 = arith.constant 0 : index
    %3 = vector.load %arg5[%c0, %c0_1, %c0_2, %c0_3] : memref<1x1x2x128xi32, #tpu.memory_space<vmem>>, vector<1x1x2x128xi32>
    %4 = vector.shape_cast %3 : vector<1x1x2x128xi32> to vector<2x128xi32>
    %c0_i32_4 = arith.constant 0 : i32
    %5 = vector.broadcast %c0_i32_4 : i32 to vector<2x128xi32>
    %6 = arith.cmpi sge, %4, %5 : vector<2x128xi32>
    %cst = arith.constant 0.000000e+00 : f32
    %7 = vector.broadcast %cst : f32 to vector<2x128xf32>
    %c0_5 = arith.constant 0 : index
    %c0_6 = arith.constant 0 : index
    %c0_7 = arith.constant 0 : index
    %c0_8 = arith.constant 0 : index
    %8 = vector.load %arg2[%c0_5, %c0_6, %c0_7, %c0_8] : memref<1x2x2x128xf32, #tpu.memory_space<vmem>>, vector<1x1x2x128xf32>
    %9 = vector.shape_cast %8 : vector<1x1x2x128xf32> to vector<2x128xf32>
    %c0_9 = arith.constant 0 : index
    %c0_10 = arith.constant 0 : index
    %c0_11 = arith.constant 0 : index
    %c0_12 = arith.constant 0 : index
    %10 = vector.load %arg3[%c0_9, %c0_10, %c0_11, %c0_12] : memref<1x2x2x128xf32, #tpu.memory_space<vmem>>, vector<1x1x2x128xf32>
    %11 = vector.shape_cast %10 : vector<1x1x2x128xf32> to vector<2x128xf32>
    %12 = arith.subf %9, %11 : vector<2x128xf32>
    %13 = arith.mulf %12, %12 : vector<2x128xf32>
    %14 = arith.addf %7, %13 : vector<2x128xf32>
    %c0_13 = arith.constant 0 : index
    %c1 = arith.constant 1 : index
    %c0_14 = arith.constant 0 : index
    %c0_15 = arith.constant 0 : index
    %15 = vector.load %arg2[%c0_13, %c1, %c0_14, %c0_15] : memref<1x2x2x128xf32, #tpu.memory_space<vmem>>, vector<1x1x2x128xf32>
    %16 = vector.shape_cast %15 : vector<1x1x2x128xf32> to vector<2x128xf32>
    %c0_16 = arith.constant 0 : index
    %c1_17 = arith.constant 1 : index
    %c0_18 = arith.constant 0 : index
    %c0_19 = arith.constant 0 : index
    %17 = vector.load %arg3[%c0_16, %c1_17, %c0_18, %c0_19] : memref<1x2x2x128xf32, #tpu.memory_space<vmem>>, vector<1x1x2x128xf32>
    %18 = vector.shape_cast %17 : vector<1x1x2x128xf32> to vector<2x128xf32>
    %19 = arith.subf %16, %18 : vector<2x128xf32>
    %20 = arith.mulf %19, %19 : vector<2x128xf32>
    %21 = arith.addf %14, %20 : vector<2x128xf32>
    %c0_20 = arith.constant 0 : index
    %c0_21 = arith.constant 0 : index
    %c0_22 = arith.constant 0 : index
    %c0_23 = arith.constant 0 : index
    %22 = vector.load %arg4[%c0_20, %c0_21, %c0_22, %c0_23] : memref<1x2x2x128xf32, #tpu.memory_space<vmem>>, vector<1x1x2x128xf32>
    %23 = vector.shape_cast %22 : vector<1x1x2x128xf32> to vector<2x128xf32>
    %c0_24 = arith.constant 0 : index
    %c1_25 = arith.constant 1 : index
    %c0_26 = arith.constant 0 : index
    %c0_27 = arith.constant 0 : index
    %24 = vector.load %arg4[%c0_24, %c1_25, %c0_26, %c0_27] : memref<1x2x2x128xf32, #tpu.memory_space<vmem>>, vector<1x1x2x128xf32>
    %25 = vector.shape_cast %24 : vector<1x1x2x128xf32> to vector<2x128xf32>
    %26 = arith.maximumf %23, %25 : vector<2x128xf32>
    %cst_28 = arith.constant 0.000000e+00 : f32
    %27 = vector.broadcast %cst_28 : f32 to vector<2x128xf32>
    %cst_29 = arith.constant 0.000000e+00 : f32
    %28 = vector.broadcast %cst_29 : f32 to vector<2x128xf32>
    %c0_30 = arith.constant 0 : index
    %c0_31 = arith.constant 0 : index
    %c0_32 = arith.constant 0 : index
    %c0_33 = arith.constant 0 : index
    %29 = vector.load %arg4[%c0_30, %c0_31, %c0_32, %c0_33] : memref<1x2x2x128xf32, #tpu.memory_space<vmem>>, vector<1x1x2x128xf32>
    %30 = vector.shape_cast %29 : vector<1x1x2x128xf32> to vector<2x128xf32>
    %31 = arith.subf %30, %26 : vector<2x128xf32>
    %32 = math.exp %31 : vector<2x128xf32>
    %33 = arith.addf %27, %32 : vector<2x128xf32>
    %c0_i32_34 = arith.constant 0 : i32
    %34 = vector.broadcast %c0_i32_34 : i32 to vector<2x128xi32>
    %35 = arith.cmpi eq, %4, %34 : vector<2x128xi32>
    %36 = arith.select %35, %30, %28 : vector<2x128xi1>, vector<2x128xf32>
    %c0_35 = arith.constant 0 : index
    %c1_36 = arith.constant 1 : index
    %c0_37 = arith.constant 0 : index
    %c0_38 = arith.constant 0 : index
    %37 = vector.load %arg4[%c0_35, %c1_36, %c0_37, %c0_38] : memref<1x2x2x128xf32, #tpu.memory_space<vmem>>, vector<1x1x2x128xf32>
    %38 = vector.shape_cast %37 : vector<1x1x2x128xf32> to vector<2x128xf32>
    %39 = arith.subf %38, %26 : vector<2x128xf32>
    %40 = math.exp %39 : vector<2x128xf32>
    %41 = arith.addf %33, %40 : vector<2x128xf32>
    %c1_i32 = arith.constant 1 : i32
    %42 = vector.broadcast %c1_i32 : i32 to vector<2x128xi32>
    %43 = arith.cmpi eq, %4, %42 : vector<2x128xi32>
    %44 = arith.select %43, %38, %36 : vector<2x128xi1>, vector<2x128xf32>
    %45 = math.log %41 : vector<2x128xf32>
    %46 = arith.addf %45, %26 : vector<2x128xf32>
    %47 = arith.subf %46, %44 : vector<2x128xf32>
    %cst_39 = arith.constant 0.000000e+00 : f32
    %48 = vector.broadcast %cst_39 : f32 to vector<2x128xf32>
    %49 = arith.select %6, %47, %48 : vector<2x128xi1>, vector<2x128xf32>
    %50 = arith.divf %40, %41 : vector<2x128xf32>
    %cst_40 = arith.constant 0.000000e+00 : f32
    %51 = vector.broadcast %cst_40 : f32 to vector<2x128xf32>
    %52 = arith.select %6, %50, %51 : vector<2x128xi1>, vector<2x128xf32>
    %c1_i32_41 = arith.constant 1 : i32
    %53 = vector.broadcast %c1_i32_41 : i32 to vector<2x128xi32>
    %54 = arith.cmpi eq, %4, %53 : vector<2x128xi32>
    %55 = arith.andi %6, %54 : vector<2x128xi1>
    %56 = arith.extui %55 : vector<2x128xi1> to vector<2x128xi32>
    %57 = arith.sitofp %56 : vector<2x128xi32> to vector<2x128xf32>
    %c0_42 = arith.constant 0 : index
    %c0_43 = arith.constant 0 : index
    %c0_44 = arith.constant 0 : index
    %58 = vector.load %arg7[%c0_42, %c0_43, %c0_44] : memref<5x2x128xf32, #tpu.memory_space<vmem>>, vector<1x2x128xf32>
    %59 = vector.shape_cast %58 : vector<1x2x128xf32> to vector<2x128xf32>
    %60 = arith.addf %59, %21 : vector<2x128xf32>
    %c0_45 = arith.constant 0 : index
    %c0_46 = arith.constant 0 : index
    %c0_47 = arith.constant 0 : index
    %61 = vector.load %arg7[%c0_45, %c0_46, %c0_47] : memref<5x2x128xf32, #tpu.memory_space<vmem>>, vector<1x2x128xf32>
    %62 = vector.shape_cast %61 : vector<1x2x128xf32> to vector<2x128xf32>
    %63 = vector.shape_cast %60 : vector<2x128xf32> to vector<1x2x128xf32>
    tpu.vector_store %arg7[%c0_45, %c0_46, %c0_47], %63 {strides = array<i32>} : memref<5x2x128xf32, #tpu.memory_space<vmem>>, vector<1x2x128xf32>,
    %c1_48 = arith.constant 1 : index
    %c0_49 = arith.constant 0 : index
    %c0_50 = arith.constant 0 : index
    %64 = vector.load %arg7[%c1_48, %c0_49, %c0_50] : memref<5x2x128xf32, #tpu.memory_space<vmem>>, vector<1x2x128xf32>
    %65 = vector.shape_cast %64 : vector<1x2x128xf32> to vector<2x128xf32>
    %66 = arith.addf %65, %49 : vector<2x128xf32>
    %c1_51 = arith.constant 1 : index
    %c0_52 = arith.constant 0 : index
    %c0_53 = arith.constant 0 : index
    %67 = vector.load %arg7[%c1_51, %c0_52, %c0_53] : memref<5x2x128xf32, #tpu.memory_space<vmem>>, vector<1x2x128xf32>
    %68 = vector.shape_cast %67 : vector<1x2x128xf32> to vector<2x128xf32>
    %69 = vector.shape_cast %66 : vector<2x128xf32> to vector<1x2x128xf32>
    tpu.vector_store %arg7[%c1_51, %c0_52, %c0_53], %69 {strides = array<i32>} : memref<5x2x128xf32, #tpu.memory_space<vmem>>, vector<1x2x128xf32>,
    %c2 = arith.constant 2 : index
    %c0_54 = arith.constant 0 : index
    %c0_55 = arith.constant 0 : index
    %70 = vector.load %arg7[%c2, %c0_54, %c0_55] : memref<5x2x128xf32, #tpu.memory_space<vmem>>, vector<1x2x128xf32>
    %71 = vector.shape_cast %70 : vector<1x2x128xf32> to vector<2x128xf32>
    %72 = arith.mulf %52, %57 : vector<2x128xf32>
    %73 = arith.addf %71, %72 : vector<2x128xf32>
    %c2_56 = arith.constant 2 : index
    %c0_57 = arith.constant 0 : index
    %c0_58 = arith.constant 0 : index
    %74 = vector.load %arg7[%c2_56, %c0_57, %c0_58] : memref<5x2x128xf32, #tpu.memory_space<vmem>>, vector<1x2x128xf32>
    %75 = vector.shape_cast %74 : vector<1x2x128xf32> to vector<2x128xf32>
    %76 = vector.shape_cast %73 : vector<2x128xf32> to vector<1x2x128xf32>
    tpu.vector_store %arg7[%c2_56, %c0_57, %c0_58], %76 {strides = array<i32>} : memref<5x2x128xf32, #tpu.memory_space<vmem>>, vector<1x2x128xf32>,
    %c3 = arith.constant 3 : index
    %c0_59 = arith.constant 0 : index
    %c0_60 = arith.constant 0 : index
    %77 = vector.load %arg7[%c3, %c0_59, %c0_60] : memref<5x2x128xf32, #tpu.memory_space<vmem>>, vector<1x2x128xf32>
    %78 = vector.shape_cast %77 : vector<1x2x128xf32> to vector<2x128xf32>
    %79 = arith.addf %78, %52 : vector<2x128xf32>
    %c3_61 = arith.constant 3 : index
    %c0_62 = arith.constant 0 : index
    %c0_63 = arith.constant 0 : index
    %80 = vector.load %arg7[%c3_61, %c0_62, %c0_63] : memref<5x2x128xf32, #tpu.memory_space<vmem>>, vector<1x2x128xf32>
    %81 = vector.shape_cast %80 : vector<1x2x128xf32> to vector<2x128xf32>
    %82 = vector.shape_cast %79 : vector<2x128xf32> to vector<1x2x128xf32>
    tpu.vector_store %arg7[%c3_61, %c0_62, %c0_63], %82 {strides = array<i32>} : memref<5x2x128xf32, #tpu.memory_space<vmem>>, vector<1x2x128xf32>,
    %c4 = arith.constant 4 : index
    %c0_64 = arith.constant 0 : index
    %c0_65 = arith.constant 0 : index
    %83 = vector.load %arg7[%c4, %c0_64, %c0_65] : memref<5x2x128xf32, #tpu.memory_space<vmem>>, vector<1x2x128xf32>
    %84 = vector.shape_cast %83 : vector<1x2x128xf32> to vector<2x128xf32>
    %85 = arith.addf %84, %57 : vector<2x128xf32>
    %c4_66 = arith.constant 4 : index
    %c0_67 = arith.constant 0 : index
    %c0_68 = arith.constant 0 : index
    %86 = vector.load %arg7[%c4_66, %c0_67, %c0_68] : memref<5x2x128xf32, #tpu.memory_space<vmem>>, vector<1x2x128xf32>
    %87 = vector.shape_cast %86 : vector<1x2x128xf32> to vector<2x128xf32>
    %88 = vector.shape_cast %85 : vector<2x128xf32> to vector<1x2x128xf32>
    tpu.vector_store %arg7[%c4_66, %c0_67, %c0_68], %88 {strides = array<i32>} : memref<5x2x128xf32, #tpu.memory_space<vmem>>, vector<1x2x128xf32>,
    %c0_i32_69 = arith.constant 0 : i32
    %89 = arith.cmpi eq, %arg1, %c0_i32_69 : i32
    %90 = arith.extui %89 : i1 to i32
    %c0_i32_70 = arith.constant 0 : i32
    %91 = arith.cmpi ne, %90, %c0_i32_70 : i32
    scf.if %91 {
      %92 = tpu.iota {dimensions = array<i32: 0>} : vector<8x128xi32>
      %c0_i32_71 = arith.constant 0 : i32
      %93 = vector.broadcast %c0_i32_71 : i32 to vector<8x128xi32>
      %94 = arith.cmpi eq, %92, %93 : vector<8x128xi32>
      %c0_72 = arith.constant 0 : index
      %c0_73 = arith.constant 0 : index
      %c0_74 = arith.constant 0 : index
      %95 = vector.load %arg7[%c0_72, %c0_73, %c0_74] : memref<5x2x128xf32, #tpu.memory_space<vmem>>, vector<1x2x128xf32>
      %96 = vector.shape_cast %95 : vector<1x2x128xf32> to vector<2x128xf32>
      %97 = vector.shape_cast %96 : vector<2x128xf32> to vector<1x2x128xf32>
      %cst_75 = arith.constant dense<0.000000e+00> : vector<1xf32>
      %98 = vector.multi_reduction <add>, %97, %cst_75 [1, 2] : vector<1x2x128xf32> to vector<1xf32>
      %99 = vector.shape_cast %98 : vector<1xf32> to vector<1x1x1xf32>
      %100 = vector.extract %99[0, 0, 0] : f32 from vector<1x1x1xf32>
      %cst_76 = arith.constant 0.000000e+00 : f32
      %101 = vector.broadcast %100 : f32 to vector<8x128xf32>
      %102 = vector.broadcast %cst_76 : f32 to vector<8x128xf32>
      %103 = arith.select %94, %101, %102 : vector<8x128xi1>, vector<8x128xf32>
      %c1_i32_77 = arith.constant 1 : i32
      %104 = vector.broadcast %c1_i32_77 : i32 to vector<8x128xi32>
      %105 = arith.cmpi eq, %92, %104 : vector<8x128xi32>
      %c1_78 = arith.constant 1 : index
      %c0_79 = arith.constant 0 : index
      %c0_80 = arith.constant 0 : index
      %106 = vector.load %arg7[%c1_78, %c0_79, %c0_80] : memref<5x2x128xf32, #tpu.memory_space<vmem>>, vector<1x2x128xf32>
      %107 = vector.shape_cast %106 : vector<1x2x128xf32> to vector<2x128xf32>
      %108 = vector.shape_cast %107 : vector<2x128xf32> to vector<1x2x128xf32>
      %cst_81 = arith.constant dense<0.000000e+00> : vector<1xf32>
      %109 = vector.multi_reduction <add>, %108, %cst_81 [1, 2] : vector<1x2x128xf32> to vector<1xf32>
      %110 = vector.shape_cast %109 : vector<1xf32> to vector<1x1x1xf32>
      %111 = vector.extract %110[0, 0, 0] : f32 from vector<1x1x1xf32>
      %112 = vector.broadcast %111 : f32 to vector<8x128xf32>
      %113 = arith.select %105, %112, %103 : vector<8x128xi1>, vector<8x128xf32>
      %c2_i32 = arith.constant 2 : i32
      %114 = vector.broadcast %c2_i32 : i32 to vector<8x128xi32>
      %115 = arith.cmpi eq, %92, %114 : vector<8x128xi32>
      %c2_82 = arith.constant 2 : index
      %c0_83 = arith.constant 0 : index
      %c0_84 = arith.constant 0 : index
      %116 = vector.load %arg7[%c2_82, %c0_83, %c0_84] : memref<5x2x128xf32, #tpu.memory_space<vmem>>, vector<1x2x128xf32>
      %117 = vector.shape_cast %116 : vector<1x2x128xf32> to vector<2x128xf32>
      %118 = vector.shape_cast %117 : vector<2x128xf32> to vector<1x2x128xf32>
      %cst_85 = arith.constant dense<0.000000e+00> : vector<1xf32>
      %119 = vector.multi_reduction <add>, %118, %cst_85 [1, 2] : vector<1x2x128xf32> to vector<1xf32>
      %120 = vector.shape_cast %119 : vector<1xf32> to vector<1x1x1xf32>
      %121 = vector.extract %120[0, 0, 0] : f32 from vector<1x1x1xf32>
      %122 = vector.broadcast %121 : f32 to vector<8x128xf32>
      %123 = arith.select %115, %122, %113 : vector<8x128xi1>, vector<8x128xf32>
      %c3_i32 = arith.constant 3 : i32
      %124 = vector.broadcast %c3_i32 : i32 to vector<8x128xi32>
      %125 = arith.cmpi eq, %92, %124 : vector<8x128xi32>
      %c3_86 = arith.constant 3 : index
      %c0_87 = arith.constant 0 : index
      %c0_88 = arith.constant 0 : index
      %126 = vector.load %arg7[%c3_86, %c0_87, %c0_88] : memref<5x2x128xf32, #tpu.memory_space<vmem>>, vector<1x2x128xf32>
      %127 = vector.shape_cast %126 : vector<1x2x128xf32> to vector<2x128xf32>
      %128 = vector.shape_cast %127 : vector<2x128xf32> to vector<1x2x128xf32>
      %cst_89 = arith.constant dense<0.000000e+00> : vector<1xf32>
      %129 = vector.multi_reduction <add>, %128, %cst_89 [1, 2] : vector<1x2x128xf32> to vector<1xf32>
      %130 = vector.shape_cast %129 : vector<1xf32> to vector<1x1x1xf32>
      %131 = vector.extract %130[0, 0, 0] : f32 from vector<1x1x1xf32>
      %132 = vector.broadcast %131 : f32 to vector<8x128xf32>
      %133 = arith.select %125, %132, %123 : vector<8x128xi1>, vector<8x128xf32>
      %c4_i32 = arith.constant 4 : i32
      %134 = vector.broadcast %c4_i32 : i32 to vector<8x128xi32>
      %135 = arith.cmpi eq, %92, %134 : vector<8x128xi32>
      %c4_90 = arith.constant 4 : index
      %c0_91 = arith.constant 0 : index
      %c0_92 = arith.constant 0 : index
      %136 = vector.load %arg7[%c4_90, %c0_91, %c0_92] : memref<5x2x128xf32, #tpu.memory_space<vmem>>, vector<1x2x128xf32>
      %137 = vector.shape_cast %136 : vector<1x2x128xf32> to vector<2x128xf32>
      %138 = vector.shape_cast %137 : vector<2x128xf32> to vector<1x2x128xf32>
      %cst_93 = arith.constant dense<0.000000e+00> : vector<1xf32>
      %139 = vector.multi_reduction <add>, %138, %cst_93 [1, 2] : vector<1x2x128xf32> to vector<1xf32>
      %140 = vector.shape_cast %139 : vector<1xf32> to vector<1x1x1xf32>
      %141 = vector.extract %140[0, 0, 0] : f32 from vector<1x1x1xf32>
      %142 = vector.broadcast %141 : f32 to vector<8x128xf32>
      %143 = arith.select %135, %142, %133 : vector<8x128xi1>, vector<8x128xf32>
      %c0_94 = arith.constant 0 : index
      %c0_95 = arith.constant 0 : index
      %c0_96 = arith.constant 0 : index
      %144 = vector.load %arg6[%c0_94, %c0_95, %c0_96] : memref<1x8x128xf32, #tpu.memory_space<vmem>>, vector<1x8x128xf32>
      %145 = vector.shape_cast %144 : vector<1x8x128xf32> to vector<8x128xf32>
      %146 = vector.shape_cast %143 : vector<8x128xf32> to vector<1x8x128xf32>
      tpu.vector_store %arg6[%c0_94, %c0_95, %c0_96], %146 {strides = array<i32>} : memref<1x8x128xf32, #tpu.memory_space<vmem>>, vector<1x8x128xf32>,
    } else {
    }
    return
  }
  func.func @transform_0(%arg0: i32, %arg1: i32) -> (i32, i32, i32, i32) {
    %c0_i32 = arith.constant 0 : i32
    %c0_i32_0 = arith.constant 0 : i32
    %c0_i32_1 = arith.constant 0 : i32
    return %arg0, %c0_i32, %arg1, %c0_i32_0 : i32, i32, i32, i32
  }
  func.func @transform_1(%arg0: i32, %arg1: i32) -> (i32, i32, i32, i32) {
    %c0_i32 = arith.constant 0 : i32
    %c0_i32_0 = arith.constant 0 : i32
    %c0_i32_1 = arith.constant 0 : i32
    return %arg0, %c0_i32, %arg1, %c0_i32_0 : i32, i32, i32, i32
  }
  func.func @transform_2(%arg0: i32, %arg1: i32) -> (i32, i32, i32, i32) {
    %c0_i32 = arith.constant 0 : i32
    %c0_i32_0 = arith.constant 0 : i32
    %c0_i32_1 = arith.constant 0 : i32
    return %arg0, %c0_i32, %arg1, %c0_i32_0 : i32, i32, i32, i32
  }
  func.func @transform_3(%arg0: i32, %arg1: i32) -> (i32, i32, i32, i32) {
    %c0_i32 = arith.constant 0 : i32
    %c0_i32_0 = arith.constant 0 : i32
    %c0_i32_1 = arith.constant 0 : i32
    return %arg0, %c0_i32, %arg1, %c0_i32_0 : i32, i32, i32, i32
  }
  func.func @transform_4(%arg0: i32, %arg1: i32) -> (i32, i32, i32) {
    %c0_i32 = arith.constant 0 : i32
    %c0_i32_0 = arith.constant 0 : i32
    %c0_i32_1 = arith.constant 0 : i32
    return %arg0, %c0_i32, %c0_i32_0 : i32, i32, i32
  }
}

</mosaic_0001>

<llo_original>
// kernel: tpu_custom_call.1
$region0: #{tpu_custom_call.1}
  #allocation0 [shape = 'u32[]', space=smem, size = 0x4, offset = 0x4, fixed_abs, tag = 'smem constant byte address 0x4 - core index']
  #allocation1 [shape = 'u32[144,128]{1,0:T(1,128)}', space=vmem, size = 0x12000, scoped, tag = 'internal scratch']
  #allocation2 [shape = 'f32[5,2,128]{2,1,0:T(2,128)}', space=vmem, size = 0x1400, scoped, tag = 'scratch operand']
  %s0 = inlined_call_operand.hbm [shape: f32[2,2,2,128], index: 0, kind: input, shape index: {}]
  %s1 = inlined_call_operand.hbm [shape: f32[2,2,2,128], index: 1, kind: input, shape index: {}]
  %s2 = inlined_call_operand.hbm [shape: f32[2,2,2,128], index: 2, kind: input, shape index: {}]
  %s3 = inlined_call_operand.vmem [shape: s32[2,1,2,128], index: 3, kind: input, shape index: {}]
  %s4 = inlined_call_operand.hbm [shape: f32[2,8,128], index: 4, kind: output, shape index: {}]
  %s5 = sld [smem:[#allocation0]]
  $region69: #{tpu_custom_call.1} parent=0
    _
  %s7 = ssub.s32 1, %s5
  %s8 = scalar_select 0, %s7, %s5
  $region1: #{tpu_custom_call.1} parent=0
    #allocation3 [shape = 'u8[4096]{0}', space=vmem, size = 0x1000, scoped, tag = 'input window, operand 0']
    #allocation4 [shape = 's32[2]{0}', space=sflag, size = 0x8, scoped, tag = 'scoped memory for tpu_custom_call.1']
    #allocation5 [shape = 's32[2]{0}', space=sflag, size = 0x8, scoped, tag = 'scoped memory for tpu_custom_call.1']
    #allocation6 [shape = 'u8[4096]{0}', space=vmem, size = 0x1000, scoped, tag = 'input window, operand 1']
    #allocation7 [shape = 's32[2]{0}', space=sflag, size = 0x8, scoped, tag = 'scoped memory for tpu_custom_call.1']
    #allocation8 [shape = 'u8[4096]{0}', space=vmem, size = 0x1000, scoped, tag = 'input window, operand 2']
    #allocation9 [shape = 'u8[8192]{0}', space=vmem, size = 0x2000, scoped, tag = 'output window, operand 0']
    %9 = vsyncpa [#allocation4], 0
    %s10 = scalar_lea.sflag [#allocation4], 1
    %11 = vsyncpa %s10, 0
    %12 = vsyncpa [#allocation7], 0
    %s13 = scalar_lea.sflag [#allocation7], 1
    %14 = vsyncpa %s13, 0
    %15 = vsyncpa [#allocation5], 0
    %s16 = scalar_lea.sflag [#allocation5], 1
    %17 = vsyncpa %s16, 0
    loop: start=0, step=1, limit=4
    $region2: #{tpu_custom_call.1} parent=1 // loop_pre_header
      _
    $region3: #{tpu_custom_call.1} parent=1 // loop_header
      %s19 = sphi 0, %s23
      %p20 = scmp.ge.s32.totalorder %s19, 4
      %s26 = sphi 0, %s38
      %s27 = sphi 0, %s34
      %s28 = sphi 0, %s26
      %s29 = sphi 0, %s27
      %s30 = sphi 0, %s28
      %s31 = sphi 0, %s29
      %s43 = sphi 0, %s45
      %s46 = sphi 0, %s43
      %s47 = sphi 0, %s46
      %s63 = sphi 0, %s47
      %s71 = sphi 0, %s73
      %s74 = sphi 0, %s71
      %s75 = sphi 0, %s74
      %s91 = sphi 0, %s75
      %s99 = sphi 0, %s101
      %s102 = sphi 0, %s99
      %s103 = sphi 0, %s102
      %s119 = sphi 0, %s103
      %s127 = sphi 0, %s129
      %s130 = sphi 0, %s127
      %s131 = sphi 0, %s130
      %s147 = sphi 0, %s131
      %s153 = sphi 0, %s155
      %s156 = sphi 0, %s153
      %s157 = sphi 0, %s156
      %s173 = sphi 0, %s157
    $region4: #{tpu_custom_call.1} parent=1 // loop_header_branch
      %22 = sbr.rel (%p20) target = $region8
    $region5: #{tpu_custom_call.1} parent=1 // loop_body
      %s24 = ssub.s32 %s19, 1
      %s25 = ssub.s32 %s19, 2
      %s32 = sadd.s32 1, %s27
      %p33 = scmp.ge.s32.totalorder %s32, 1
      %s34 = scalar_select %p33, 0, %s32
      %s35 = sadd.s32 1, %s26
      %s36 = scalar_select %p33, %s35, %s26
      %p37 = scmp.ge.s32.totalorder %s36, 2
      %s38 = scalar_select %p37, 0, %s36
      %s39 = ssub.s32 %s26, %s38
      %s40 = ssub.s32 %s27, %s34
      %s41 = sor.u32 %s39, %s40
      %p42 = scmp.eq.s32.totalorder %s41, 0
      %s44 = sadd.s32 %s43, 1
      %s45 = scalar_select %p42, %s43, %s44
      %p48 = pneg %p42
      %p49 = scmp.eq.s32.totalorder %s19, 1
      %p50 = por %p48, %p49
      %p51 = scmp.ne.s32.totalorder %s43, %s46
      %p52 = scmp.eq.s32.totalorder %s19, 0
      %p53 = por %p51, %p52
      %p54 = scmp.ne.s32.totalorder %s43, %s46
      %p55 = scmp.eq.s32.totalorder %s24, 1
      %p56 = por %p54, %p55
      %p57 = scmp.ne.s32.totalorder %s46, %s47
      %p58 = scmp.eq.s32.totalorder %s24, 0
      %p59 = por %p57, %p58
      %p60 = scmp.ne.s32.totalorder %s46, %s47
      %p61 = scmp.eq.s32.totalorder %s25, 1
      %p62 = por %p60, %p61
      %p64 = scmp.ne.s32.totalorder %s47, %s63
      %p65 = scmp.eq.s32.totalorder %s25, 0
      %p66 = por %p64, %p65
      %s67 = ssub.s32 %s26, %s38
      %s68 = ssub.s32 %s27, %s34
      %s69 = sor.u32 %s67, %s68
      %p70 = scmp.eq.s32.totalorder %s69, 0
      %s72 = sadd.s32 %s71, 1
      %s73 = scalar_select %p70, %s71, %s72
      %p76 = pneg %p70
      %p77 = scmp.eq.s32.totalorder %s19, 1
      %p78 = por %p76, %p77
      %p79 = scmp.ne.s32.totalorder %s71, %s74
      %p80 = scmp.eq.s32.totalorder %s19, 0
      %p81 = por %p79, %p80
      %p82 = scmp.ne.s32.totalorder %s71, %s74
      %p83 = scmp.eq.s32.totalorder %s24, 1
      %p84 = por %p82, %p83
      %p85 = scmp.ne.s32.totalorder %s74, %s75
      %p86 = scmp.eq.s32.totalorder %s24, 0
      %p87 = por %p85, %p86
      %p88 = scmp.ne.s32.totalorder %s74, %s75
      %p89 = scmp.eq.s32.totalorder %s25, 1
      %p90 = por %p88, %p89
      %p92 = scmp.ne.s32.totalorder %s75, %s91
      %p93 = scmp.eq.s32.totalorder %s25, 0
      %p94 = por %p92, %p93
      %s95 = ssub.s32 %s26, %s38
      %s96 = ssub.s32 %s27, %s34
      %s97 = sor.u32 %s95, %s96
      %p98 = scmp.eq.s32.totalorder %s97, 0
      %s100 = sadd.s32 %s99, 1
      %s101 = scalar_select %p98, %s99, %s100
      %p104 = pneg %p98
      %p105 = scmp.eq.s32.totalorder %s19, 1
      %p106 = por %p104, %p105
      %p107 = scmp.ne.s32.totalorder %s99, %s102
      %p108 = scmp.eq.s32.totalorder %s19, 0
      %p109 = por %p107, %p108
      %p110 = scmp.ne.s32.totalorder %s99, %s102
      %p111 = scmp.eq.s32.totalorder %s24, 1
      %p112 = por %p110, %p111
      %p113 = scmp.ne.s32.totalorder %s102, %s103
      %p114 = scmp.eq.s32.totalorder %s24, 0
      %p115 = por %p113, %p114
      %p116 = scmp.ne.s32.totalorder %s102, %s103
      %p117 = scmp.eq.s32.totalorder %s25, 1
      %p118 = por %p116, %p117
      %p120 = scmp.ne.s32.totalorder %s103, %s119
      %p121 = scmp.eq.s32.totalorder %s25, 0
      %p122 = por %p120, %p121
      %s123 = ssub.s32 %s26, %s38
      %s124 = ssub.s32 %s27, %s34
      %s125 = sor.u32 %s123, %s124
      %p126 = scmp.eq.s32.totalorder %s125, 0
      %s128 = sadd.s32 %s127, 1
      %s129 = scalar_select %p126, %s127, %s128
      %p132 = pneg %p126
      %p133 = scmp.eq.s32.totalorder %s19, 1
      %p134 = por %p132, %p133
      %p135 = scmp.ne.s32.totalorder %s127, %s130
      %p136 = scmp.eq.s32.totalorder %s19, 0
      %p137 = por %p135, %p136
      %p138 = scmp.ne.s32.totalorder %s127, %s130
      %p139 = scmp.eq.s32.totalorder %s24, 1
      %p140 = por %p138, %p139
      %p141 = scmp.ne.s32.totalorder %s130, %s131
      %p142 = scmp.eq.s32.totalorder %s24, 0
      %p143 = por %p141, %p142
      %p144 = scmp.ne.s32.totalorder %s130, %s131
      %p145 = scmp.eq.s32.totalorder %s25, 1
      %p146 = por %p144, %p145
      %p148 = scmp.ne.s32.totalorder %s131, %s147
      %p149 = scmp.eq.s32.totalorder %s25, 0
      %p150 = por %p148, %p149
      %s151 = ssub.s32 %s26, %s38
      %p152 = scmp.eq.s32.totalorder %s151, 0
      %s154 = sadd.s32 %s153, 1
      %s155 = scalar_select %p152, %s153, %s154
      %p158 = pneg %p152
      %p159 = scmp.eq.s32.totalorder %s19, 1
      %p160 = por %p158, %p159
      %p161 = scmp.ne.s32.totalorder %s153, %s156
      %p162 = scmp.eq.s32.totalorder %s19, 0
      %p163 = por %p161, %p162
      %p164 = scmp.ne.s32.totalorder %s153, %s156
      %p165 = scmp.eq.s32.totalorder %s24, 1
      %p166 = por %p164, %p165
      %p167 = scmp.ne.s32.totalorder %s156, %s157
      %p168 = scmp.eq.s32.totalorder %s24, 0
      %p169 = por %p167, %p168
      %p170 = scmp.ne.s32.totalorder %s156, %s157
      %p171 = scmp.eq.s32.totalorder %s25, 1
      %p172 = por %p170, %p171
      %p174 = scmp.ne.s32.totalorder %s157, %s173
      %p175 = scmp.eq.s32.totalorder %s25, 0
      %p176 = por %p174, %p175
      %p177 = scmp.le.s32.totalorder 1, %s19
      %p178 = scmp.lt.s32.totalorder %s19, 3
      %p179 = pnand %p177, %p178
      %p180 = pneg %p179
      // Predicated region
      $region9: #{tpu_custom_call.1} parent=5 // pred_check
        _
      $region10: #{tpu_custom_call.1} parent=5 // pred_check_branch
        %182 = sbr.rel (%p179) target = $region12
      $region11: #{tpu_custom_call.1} parent=5 // pred_region
        %s183 = ssub.s32 %s19, 1
      $region12: #{tpu_custom_call.1} parent=5 // pred_fallthru
        _
      %p184 = scmp.lt.s32.totalorder %s19, 2
      // Predicated region
      $region13: #{tpu_custom_call.1} parent=5 // pred_check
        %p185 = pneg %p184
      $region14: #{tpu_custom_call.1} parent=5 // pred_check_branch
        %187 = sbr.rel (%p185) target = $region16
      $region15: #{tpu_custom_call.1} parent=5 // pred_region
        // Predicated region
        $region17: #{tpu_custom_call.1} parent=15 // pred_check
          %p188 = pneg %p53
        $region18: #{tpu_custom_call.1} parent=15 // pred_check_branch
          %190 = sbr.rel (%p188) target = $region20
        $region19: #{tpu_custom_call.1} parent=15 // pred_region
          %s191 = sand.u32 %s43, 1
          %s192 = scalar_lea.sflag [#allocation4], %s191
          %s193 = sand.u32 %s43, 1
          %s194 = smul.addr %s193, 4
          %s195 = scalar_lea.vmem [#allocation3], %s194
          %s197 = ssub.s32 64, 64
          %198 = vsyncadd %s192, %s197
          %s199 = smul.addr %s26, 2
          %s200 = sadd.s32 %s27, %s199
          %s201 = smul.addr %s200, 32
          %s202 = scalar_lea.hbm %s0, %s201
          %s203 = sshll.u32 %s195, 4
          %s204 = int_to_ptr.vmem [resolvable:$true] %s203
          %209 = dma.hbm_to_vmem [thread:$0]  %s202, 64, %s204, %s192, 32, 32, 2
        $region20: #{tpu_custom_call.1} parent=15 // pred_fallthru
          _
        // Predicated region
        $region21: #{tpu_custom_call.1} parent=15 // pred_check
          %p210 = pneg %p81
        $region22: #{tpu_custom_call.1} parent=15 // pred_check_branch
          %212 = sbr.rel (%p210) target = $region24
        $region23: #{tpu_custom_call.1} parent=15 // pred_region
          %s213 = sand.u32 %s19, 1
          %s214 = scalar_lea.sflag [#allocation7], %s213
          %s215 = sand.u32 %s71, 1
          %s216 = smul.addr %s215, 4
          %s217 = scalar_lea.vmem [#allocation6], %s216
          %s219 = ssub.s32 64, 64
          %220 = vsyncadd %s214, %s219
          %s221 = smul.addr %s26, 2
          %s222 = sadd.s32 %s27, %s221
          %s223 = smul.addr %s222, 32
          %s224 = scalar_lea.hbm %s1, %s223
          %s225 = sshll.u32 %s217, 4
          %s226 = int_to_ptr.vmem [resolvable:$true] %s225
          %231 = dma.hbm_to_vmem [thread:$0]  %s224, 64, %s226, %s214, 32, 32, 2
        $region24: #{tpu_custom_call.1} parent=15 // pred_fallthru
          _
        // Predicated region
        $region25: #{tpu_custom_call.1} parent=15 // pred_check
          %p232 = pneg %p109
        $region26: #{tpu_custom_call.1} parent=15 // pred_check_branch
          %234 = sbr.rel (%p232) target = $region28
        $region27: #{tpu_custom_call.1} parent=15 // pred_region
          %s235 = sand.u32 %s19, 1
          %s236 = scalar_lea.sflag [#allocation7], %s235
          %s237 = sand.u32 %s99, 1
          %s238 = smul.addr %s237, 4
          %s239 = scalar_lea.vmem [#allocation8], %s238
          %s241 = ssub.s32 64, 64
          %242 = vsyncadd %s236, %s241
          %s243 = smul.addr %s26, 2
          %s244 = sadd.s32 %s27, %s243
          %s245 = smul.addr %s244, 32
          %s246 = scalar_lea.hbm %s2, %s245
          %s247 = sshll.u32 %s239, 4
          %s248 = int_to_ptr.vmem [resolvable:$true] %s247
          %253 = dma.hbm_to_vmem [thread:$0]  %s246, 64, %s248, %s236, 32, 32, 2
        $region28: #{tpu_custom_call.1} parent=15 // pred_fallthru
          _
        // Predicated region
        $region29: #{tpu_custom_call.1} parent=15 // pred_check
          %p254 = pneg %p137
        $region30: #{tpu_custom_call.1} parent=15 // pred_check_branch
          %256 = sbr.rel (%p254) target = $region32
        $region31: #{tpu_custom_call.1} parent=15 // pred_region
          %p257 = scmp.lt.s32.totalorder %s26, 1
          %s258 = scalar_select %p257, %s26, 1
          %p259 = scmp.lt.s32.totalorder %s27, 0
          %s260 = scalar_select %p259, %s27, 0
          %s261 = sadd.s32 %s260, %s258
          %s262 = smul.addr %s261, 2
          %s263 = scalar_lea.vmem %s3, %s262
        $region32: #{tpu_custom_call.1} parent=15 // pred_fallthru
          _
      $region16: #{tpu_custom_call.1} parent=5 // pred_fallthru
        _
      %p264 = scmp.le.s32.totalorder 1, %s19
      %p265 = scmp.lt.s32.totalorder %s19, 3
      %p266 = pnand %p264, %p265
      %p267 = pneg %p266
      // Predicated region
      $region33: #{tpu_custom_call.1} parent=5 // pred_check
        _
      $region34: #{tpu_custom_call.1} parent=5 // pred_check_branch
        %269 = sbr.rel (%p266) target = $region36
      $region35: #{tpu_custom_call.1} parent=5 // pred_region
        %s270 = ssub.s32 %s19, 1
        %s271 = sand.u32 %s46, 1
        %s272 = scalar_lea.sflag [#allocation4], %s271
        %s273 = sand.u32 %s46, 1
        %s274 = smul.addr %s273, 4
        %s275 = scalar_lea.vmem [#allocation3], %s274
        // Predicated region
        $region37: #{tpu_custom_call.1} parent=35 // pred_check
          %p276 = pneg %p59
        $region38: #{tpu_custom_call.1} parent=35 // pred_check_branch
          %278 = sbr.rel (%p276) target = $region40
        $region39: #{tpu_custom_call.1} parent=35 // pred_region
          %279 = dma.done %s272, 64
        $region40: #{tpu_custom_call.1} parent=35 // pred_fallthru
          _
        %s280 = sand.u32 %s24, 1
        %s281 = scalar_lea.sflag [#allocation7], %s280
        %s282 = sand.u32 %s74, 1
        %s283 = smul.addr %s282, 4
        %s284 = scalar_lea.vmem [#allocation6], %s283
        // Predicated region
        $region41: #{tpu_custom_call.1} parent=35 // pred_check
          %p285 = pneg %p87
        $region42: #{tpu_custom_call.1} parent=35 // pred_check_branch
          %287 = sbr.rel (%p285) target = $region44
        $region43: #{tpu_custom_call.1} parent=35 // pred_region
          %288 = dma.done %s281, 64
        $region44: #{tpu_custom_call.1} parent=35 // pred_fallthru
          _
        %s289 = sand.u32 %s24, 1
        %s290 = scalar_lea.sflag [#allocation7], %s289
        %s291 = sand.u32 %s102, 1
        %s292 = smul.addr %s291, 4
        %s293 = scalar_lea.vmem [#allocation8], %s292
        // Predicated region
        $region45: #{tpu_custom_call.1} parent=35 // pred_check
          %p294 = pneg %p115
        $region46: #{tpu_custom_call.1} parent=35 // pred_check_branch
          %296 = sbr.rel (%p294) target = $region48
        $region47: #{tpu_custom_call.1} parent=35 // pred_region
          %297 = dma.done %s290, 64
        $region48: #{tpu_custom_call.1} parent=35 // pred_fallthru
          _
        %s298 = sand.u32 %s46, 1
        %s299 = scalar_lea.sflag [#allocation4], %s298
        %s300 = sand.u32 %s46, 1
        %s301 = smul.addr %s300, 4
        %s302 = scalar_lea.vmem [#allocation3], %s301
        %p303 = pneg %p59
        %p304 = pneg %p56
        %s305 = sand.u32 %s24, 1
        %s306 = scalar_lea.sflag [#allocation7], %s305
        %s307 = sand.u32 %s74, 1
        %s308 = smul.addr %s307, 4
        %s309 = scalar_lea.vmem [#allocation6], %s308
        %p310 = pneg %p87
        %p311 = pneg %p84
        %s312 = sand.u32 %s24, 1
        %s313 = scalar_lea.sflag [#allocation7], %s312
        %s314 = sand.u32 %s102, 1
        %s315 = smul.addr %s314, 4
        %s316 = scalar_lea.vmem [#allocation8], %s315
        %p317 = pneg %p115
        %p318 = pneg %p112
        %p319 = scmp.lt.s32.totalorder %s28, 1
        %s320 = scalar_select %p319, %s28, 1
        %p321 = scmp.lt.s32.totalorder %s29, 0
        %s322 = scalar_select %p321, %s29, 0
        %s323 = sadd.s32 %s322, %s320
        %s324 = smul.addr %s323, 2
        %s325 = scalar_lea.vmem %s3, %s324
        %p326 = pneg %p143
        %p327 = pneg %p140
        %p328 = pneg %p169
        %p329 = pneg %p166
        %s330 = sand.u32 %s156, 1
        %s331 = scalar_lea.sflag [#allocation5], %s330
        %s332 = sand.u32 %s156, 1
        %s333 = smul.addr %s332, 8
        %s334 = scalar_lea.vmem [#allocation9], %s333
        %p335 = scmp.lt.s32.totalorder %s28, 1
        %s336 = scalar_select %p335, %s28, 1
        %p337 = scmp.lt.s32.totalorder %s29, 0
        %s338 = scalar_select %p337, %s29, 0
        %s339 = sadd.s32 %s338, %s336
        %s340 = smul.addr %s339, 2
        %s341 = scalar_lea.vmem %s3, %s340
        %p342 = scmp.eq.s32.totalorder %s29, 0
        // Predicated region
        $region49: #{tpu_custom_call.1} parent=35 // pred_check
          %p343 = pneg %p342
        $region50: #{tpu_custom_call.1} parent=35 // pred_check_branch
          %345 = sbr.rel (%p343) target = $region52
        $region51: #{tpu_custom_call.1} parent=35 // pred_region
          %346 = vst [vmem:[#allocation2] sm:$0x3] 0.0
          %347 = vst [vmem:[#allocation2 + $0x2] sm:$0x3] 0.0
          %348 = vst [vmem:[#allocation2 + $0x4] sm:$0x3] 0.0
          %349 = vst [vmem:[#allocation2 + $0x6] sm:$0x3] 0.0
          %350 = vst [vmem:[#allocation2 + $0x8] sm:$0x3] 0.0
        $region52: #{tpu_custom_call.1} parent=35 // pred_fallthru
          _
        %v351 = vld [vmem:[%s341] sm:$0x3]
        %vm352 = vcmp.ge.s32.totalorder %v351, 0
        %v353 = vld [vmem:[%s275] sm:$0x3]
        %v354 = vld [vmem:[%s284] sm:$0x3]
        %v355 = vsub.f32 %v353, %v354
        %v356 = vmul.f32 %v355, %v355
        %v357 = vadd.f32 %v356, 0.0
        %s358 = scalar_lea.vmem %s275, 2 [#allocation3]
        %v359 = vld [vmem:[%s358] sm:$0x3]
        %s360 = scalar_lea.vmem %s284, 2 [#allocation6]
        %v361 = vld [vmem:[%s360] sm:$0x3]
        %v362 = vsub.f32 %v359, %v361
        %v363 = vmul.f32 %v362, %v362
        %v364 = vadd.f32 %v357, %v363
        %v365 = vld [vmem:[%s293] sm:$0x3]
        %s366 = scalar_lea.vmem %s293, 2 [#allocation8]
        %v367 = vld [vmem:[%s366] sm:$0x3]
        %v368 = vmax.f32 %v365, %v367
        %v369 = vsub.f32 %v365, %v368
        %v370 = vmul.f32 %v369, 1.442695
        %v371 = vpow.pop %v370
        %v372 = vadd.f32 %v371, 0.0
        %vm373 = vcmp.eq.s32.totalorder %v351, 0
        %v374 = vsel %vm373, %v365, 0.0
        %v375 = vsub.f32 %v367, %v368
        %v376 = vmul.f32 %v375, 1.442695
        %v377 = vpow.pop %v376
        %v378 = vadd.f32 %v372, %v377
        %vm379 = vcmp.eq.s32.totalorder %v351, 1
        %v380 = vsel %vm379, %v367, %v374
        %v381 = vlog2.pop %v378
        %v382 = vmul.f32 %v381, 0.6931472
        %v383 = vadd.f32 %v382, %v368
        %v384 = vsub.f32 %v383, %v380
        %v385 = vsel %vm352, %v384, 0.0
        %v386 = vrcp.pop %v378
        %v387 = vmul.f32 %v377, %v386
        %v388 = vsel %vm352, %v387, 0.0
        %vm389 = vmand %vm352, %vm379
        %v390 = vsel %vm389, 1, 0
        %v391 = vcvt.s32.f32 %v390
        %v392 = vld [vmem:[#allocation2] sm:$0x3]
        %v393 = vadd.f32 %v392, %v364
        %394 = vst [vmem:[#allocation2] sm:$0x3] %v393
        %s395 = scalar_lea.vmem [#allocation2], 2
        %v396 = vld [vmem:[%s395] sm:$0x3]
        %v397 = vadd.f32 %v396, %v385
        %398 = vst [vmem:[%s395] sm:$0x3] %v397
        %s399 = scalar_lea.vmem [#allocation2], 4
        %v400 = vld [vmem:[%s399] sm:$0x3]
        %v401 = vmul.f32 %v388, %v391
        %v402 = vadd.f32 %v400, %v401
        %403 = vst [vmem:[%s399] sm:$0x3] %v402
        %s404 = scalar_lea.vmem [#allocation2], 6
        %v405 = vld [vmem:[%s404] sm:$0x3]
        %v406 = vadd.f32 %v405, %v388
        %407 = vst [vmem:[%s404] sm:$0x3] %v406
        %s408 = scalar_lea.vmem [#allocation2], 8
        %v409 = vld [vmem:[%s408] sm:$0x3]
        %v410 = vadd.f32 %v409, %v391
        %411 = vst [vmem:[%s408] sm:$0x3] %v410
        // Predicated region
        $region53: #{tpu_custom_call.1} parent=35 // pred_check
          %p412 = pneg %p342
        $region54: #{tpu_custom_call.1} parent=35 // pred_check_branch
          %414 = sbr.rel (%p412) target = $region56
        $region55: #{tpu_custom_call.1} parent=35 // pred_region
          %v415 = vlaneseq
          %v416 = vshrl.u32 %v415, 7
          %vm417 = vcmp.eq.s32.totalorder %v416, 0
          %v418 = vld [vmem:[#allocation2] sm:$0x3]
          %vm419 = vcmask 1041408
          %v420 = vsel %vm419, %v418, 0.0
          %421 = vadd.xlane.f32.xlu0 %v420
          %v422 = vpop.xlane.xlu0 %421
          %v423 = vrot.slane %v422, 4
          %v424 = vadd.f32 %v422, %v423
          %v425 = vrot.slane %v424, 2
          %v426 = vadd.f32 %v424, %v425
          %v427 = vrot.slane %v426, 1
          %v428 = vadd.f32 %v426, %v427
          %s429 = vtos %v428
          %v430 = vstv %s429
          %v431 = vsel %vm417, %v430, 0.0
          %vm432 = vcmp.eq.s32.totalorder %v416, 1
          %v433 = vld [vmem:[%s395] sm:$0x3]
          %v434 = vsel %vm419, %v433, 0.0
          %435 = vadd.xlane.f32.xlu0 %v434
          %v436 = vpop.xlane.xlu0 %435
          %v437 = vrot.slane %v436, 4
          %v438 = vadd.f32 %v436, %v437
          %v439 = vrot.slane %v438, 2
          %v440 = vadd.f32 %v438, %v439
          %v441 = vrot.slane %v440, 1
          %v442 = vadd.f32 %v440, %v441
          %s443 = vtos %v442
          %v444 = vstv %s443
          %v445 = vsel %vm432, %v444, %v431
          %vm446 = vcmp.eq.s32.totalorder %v416, 2
          %v447 = vld [vmem:[%s399] sm:$0x3]
          %v448 = vsel %vm419, %v447, 0.0
          %449 = vadd.xlane.f32.xlu0 %v448
          %v450 = vpop.xlane.xlu0 %449
          %v451 = vrot.slane %v450, 4
          %v452 = vadd.f32 %v450, %v451
          %v453 = vrot.slane %v452, 2
          %v454 = vadd.f32 %v452, %v453
          %v455 = vrot.slane %v454, 1
          %v456 = vadd.f32 %v454, %v455
          %s457 = vtos %v456
          %v458 = vstv %s457
          %v459 = vsel %vm446, %v458, %v445
          %vm460 = vcmp.eq.s32.totalorder %v416, 3
          %v461 = vld [vmem:[%s404] sm:$0x3]
          %v462 = vsel %vm419, %v461, 0.0
          %463 = vadd.xlane.f32.xlu0 %v462
          %v464 = vpop.xlane.xlu0 %463
          %v465 = vrot.slane %v464, 4
          %v466 = vadd.f32 %v464, %v465
          %v467 = vrot.slane %v466, 2
          %v468 = vadd.f32 %v466, %v467
          %v469 = vrot.slane %v468, 1
          %v470 = vadd.f32 %v468, %v469
          %s471 = vtos %v470
          %v472 = vstv %s471
          %v473 = vsel %vm460, %v472, %v459
          %vm474 = vcmp.eq.s32.totalorder %v416, 4
          %v475 = vld [vmem:[%s408] sm:$0x3]
          %v476 = vsel %vm419, %v475, 0.0
          %477 = vadd.xlane.f32.xlu0 %v476
          %v478 = vpop.xlane.xlu0 %477
          %v479 = vrot.slane %v478, 4
          %v480 = vadd.f32 %v478, %v479
          %v481 = vrot.slane %v480, 2
          %v482 = vadd.f32 %v480, %v481
          %v483 = vrot.slane %v482, 1
          %v484 = vadd.f32 %v482, %v483
          %s485 = vtos %v484
          %v486 = vstv %s485
          %v487 = vsel %vm474, %v486, %v473
          %488 = vst [vmem:[%s334] sm:$0xff] %v487
        $region56: #{tpu_custom_call.1} parent=35 // pred_fallthru
          _
        %s489 = sand.u32 %s156, 1
        %s490 = scalar_lea.sflag [#allocation5], %s489
        %s491 = sand.u32 %s156, 1
        %s492 = smul.addr %s491, 8
        %s493 = scalar_lea.vmem [#allocation9], %s492
        // Predicated region
        $region57: #{tpu_custom_call.1} parent=35 // pred_check
          %p494 = pneg %p166
        $region58: #{tpu_custom_call.1} parent=35 // pred_check_branch
          %496 = sbr.rel (%p494) target = $region60
        $region59: #{tpu_custom_call.1} parent=35 // pred_region
          %s498 = ssub.s32 128, 128
          %499 = vsyncadd %s490, %s498
          %s500 = smul.addr %s28, 128
          %s501 = scalar_lea.hbm %s4, %s500
          %s503 = sshll.u32 %s493, 4
          %s504 = int_to_ptr.vmem [resolvable:$true] %s503
          %506 = dma.vmem_to_hbm [thread:$0]  %s504, 128, %s501, %s490
        $region60: #{tpu_custom_call.1} parent=35 // pred_fallthru
          _
      $region36: #{tpu_custom_call.1} parent=5 // pred_fallthru
        _
      %p507 = scmp.le.s32.totalorder 2, %s19
      // Predicated region
      $region61: #{tpu_custom_call.1} parent=5 // pred_check
        %p508 = pneg %p507
      $region62: #{tpu_custom_call.1} parent=5 // pred_check_branch
        %510 = sbr.rel (%p508) target = $region64
      $region63: #{tpu_custom_call.1} parent=5 // pred_region
        %s511 = ssub.s32 %s19, 2
        // Predicated region
        $region65: #{tpu_custom_call.1} parent=63 // pred_check
          %p512 = pneg %p172
        $region66: #{tpu_custom_call.1} parent=63 // pred_check_branch
          %514 = sbr.rel (%p512) target = $region68
        $region67: #{tpu_custom_call.1} parent=63 // pred_region
          %s515 = sand.u32 %s157, 1
          %s516 = scalar_lea.sflag [#allocation5], %s515
          %s517 = sand.u32 %s157, 1
          %s518 = smul.addr %s517, 8
          %s519 = scalar_lea.vmem [#allocation9], %s518
          %520 = dma.done %s516, 128
        $region68: #{tpu_custom_call.1} parent=63 // pred_fallthru
          _
      $region64: #{tpu_custom_call.1} parent=5 // pred_fallthru
        _
    $region6: #{tpu_custom_call.1} parent=1 // loop_footer
      %s23 = sadd.s32 1, %s19
    $region7: #{tpu_custom_call.1} parent=1 // loop_footer_branch
      %18 = sbr.rel target = $region3
    $region8: #{tpu_custom_call.1} parent=1 // loop_exit
      _
    %521 = vsyncpa [#allocation4], 1
    %s522 = scalar_lea.sflag [#allocation4], 1
    %523 = vsyncpa %s522, 1
    %524 = vsyncpa [#allocation7], 1
    %s525 = scalar_lea.sflag [#allocation7], 1
    %526 = vsyncpa %s525, 1
    %527 = vsyncpa [#allocation5], 1
    %s528 = scalar_lea.sflag [#allocation5], 1
    %529 = vsyncpa %s528, 1

</llo_original>
